<compile_context>
chip_gen: v6e
topology: v6e:2x2x1
jax: 0.10.0
libtpu: 0.0.40
codegen_flags: <defaults>
</compile_context>

<pallas_src>
import math

import jax
import jax.numpy as jnp
from jax.experimental import pallas as pl
from jax.experimental.pallas import tpu as pltpu


def _round_up(v, m):
    return (v + m - 1) // m * m


def _make_kernel(D, K, Dp, TN):
    def kernel(x_ref, wf_ref, bf_ref, zm_ref, zv_ref, ent_ref):
        x = x_ref[...]                                            # (TN, Fp) f32

        # one fused MXU pass: [z | J@U_1 .. J@U_K] = x @ [W | Uw'] + [b | Ub']
        # (bf16 operands, f32 accumulation)
        acc = jnp.dot(x.astype(jnp.bfloat16), wf_ref[...],
                      preferred_element_type=jnp.float32) + bf_ref[...]   # (TN,(K+1)*Dp)

        z = acc[:, :Dp]                                           # (TN, Dp) model mean

        # diag(J J^T) for a linear model with unit prior: ||x||^2 + 1 (same for every d)
        jjt = jnp.sum(x * x, axis=-1, keepdims=True) + 1.0        # (TN, 1), f32

        # low-rank GGN correction: sum_k (J@U_k)^2 with eig/(eig+1) folded into U (sqrt).
        # Static unroll over K -> pure VPU work that overlaps the MXU stream.
        neg = jnp.zeros((TN, Dp), jnp.float32)
        for k in range(K):
            pk = acc[:, (k + 1) * Dp:(k + 2) * Dp]                # lane-aligned slice
            neg = neg + pk * pk

        z_var = jnp.maximum(jjt - neg, 0.0)                       # guard: variance >= 0

        zm_ref[...] = z
        zv_ref[...] = z_var

        # probit-marginalized categorical entropy; padded logit columns masked out.
        lane = jax.lax.broadcasted_iota(jnp.int32, (TN, Dp), 1)
        valid = lane < D
        kappa = jax.lax.rsqrt(1.0 + (math.pi / 8.0) * z_var)      # EUP rsqrt
        logits = jnp.where(valid, z * kappa, -1e30)
        m = jnp.max(logits, axis=-1, keepdims=True)
        ex = jnp.where(valid, jnp.exp(logits - m), 0.0)
        denom = jnp.sum(ex, axis=-1, keepdims=True)
        p = ex * pl.reciprocal(denom, approx=True)                # EUP divide (free slot)
        logp = (logits - m) - jnp.log(denom)
        ent = -jnp.sum(jnp.where(valid, p * logp, 0.0), axis=-1, keepdims=True)  # (TN,1)
        ent_ref[...] = jnp.broadcast_to(ent, (TN, 128))           # lane-dense store

    return kernel


def ood_detector_forward(x, W, b, U_w, U_b, eigs):
    """Returns (z_mean, z_var, entropy). OodDetector.forward == the entropy output."""
    N, F = x.shape
    D = W.shape[1]
    K = eigs.shape[0]
    f32 = jnp.float32

    # --- vreg-aligned padded sizes and N tiling -------------------------------------
    Dp = _round_up(D, 128)
    Fp = _round_up(F, 128)
    TN = 256
    Np = _round_up(N, 8)
    if Np <= TN:
        TN = Np
    else:
        Np = _round_up(Np, TN)

    # --- one-time weight prep (tiny, done in XLA) -----------------------------------
    # scalar prior, log_prior_scale=0 -> sqrt_prior == 1 (no Jacobian rescaling needed)
    eigs_c = jnp.maximum(eigs.astype(f32), 0.0)
    sqrt_s = jnp.sqrt(eigs_c / (eigs_c + 1.0))                    # (K,)

    # fold eig/(eig+1) into the basis columns so neg = sum_k proj_k^2
    Uw_s = U_w.astype(f32) * sqrt_s[None, None, :]                # (F, D, K)
    Ub_s = U_b.astype(f32) * sqrt_s[None, :]                      # (D, K)

    # pad to (8,128) geometry; low-rank columns ordered as k*Dp + d
    W_p = jnp.zeros((Fp, Dp), f32).at[:F, :D].set(W.astype(f32))
    Uw_p = jnp.zeros((Fp, K, Dp), f32).at[:F, :, :D].set(jnp.transpose(Uw_s, (0, 2, 1)))
    b_p = jnp.zeros((Dp,), f32).at[:D].set(b.astype(f32))
    Ub_p = jnp.zeros((K, Dp), f32).at[:, :D].set(jnp.transpose(Ub_s, (1, 0)))

    Ctot = (K + 1) * Dp
    Wf = jnp.concatenate([W_p, Uw_p.reshape(Fp, K * Dp)], axis=1).astype(jnp.bfloat16)
    bf = jnp.concatenate([b_p, Ub_p.reshape(K * Dp)])[None, :].astype(f32)   # (1, Ctot)

    x_p = jnp.zeros((Np, Fp), f32).at[:N, :F].set(x.astype(f32))

    # --- pallas call -----------------------------------------------------------------
    kernel = _make_kernel(D, K, Dp, TN)
    out_shapes = (
        jax.ShapeDtypeStruct((Np, Dp), f32),    # z_mean (padded)
        jax.ShapeDtypeStruct((Np, Dp), f32),    # z_var  (padded)
        jax.ShapeDtypeStruct((Np, 128), f32),   # entropy (lane-broadcast)
    )

    z_mean, z_var, ent = pl.pallas_call(
        kernel,
        out_shape=out_shapes,
        grid=(Np // TN,),
        in_specs=[
            pl.BlockSpec((TN, Fp), lambda i: (i, 0)),     # x: tiled over batch
            pl.BlockSpec((Fp, Ctot), lambda i: (0, 0)),   # fused weights: VMEM-resident
            pl.BlockSpec((1, Ctot), lambda i: (0, 0)),    # fused bias: VMEM-resident
        ],
        out_specs=(
            pl.BlockSpec((TN, Dp), lambda i: (i, 0)),
            pl.BlockSpec((TN, Dp), lambda i: (i, 0)),
            pl.BlockSpec((TN, 128), lambda i: (i, 0)),
        ),
        compiler_params=pltpu.CompilerParams(
            dimension_semantics=("parallel",),   # shards N tiles across TCs on v7x
        ),
    )(x_p, Wf, bf)

    return z_mean[:N, :D], z_var[:N, :D], ent[:N, 0]


def reference(x, W, b, U_w, U_b, eigs):
    """Pure-JAX f32 reference of the same math (mirrors the PyTorch module)."""
    z = x @ W + b[None, :]
    jjt = jnp.sum(x * x, axis=-1, keepdims=True) + 1.0
    e = jnp.maximum(eigs, 0.0)
    s = e / (e + 1.0)
    proj = jnp.einsum("nf,fdk->ndk", x, U_w) + U_b[None, :, :]
    neg = jnp.sum((proj ** 2) * s[None, None, :], axis=-1)
    z_var = jjt - neg
    logits = z / jnp.sqrt(1.0 + (math.pi / 8.0) * z_var)
    p = jax.nn.softmax(logits, axis=-1)
    ent = -jnp.sum(p * jax.nn.log_softmax(logits, axis=-1), axis=-1)
    return z, z_var, ent


if __name__ == "__main__":
    N, F, D, K = 2, 32, 8, 10   # batch, input features, output dim, num_eigs

    key = jax.random.PRNGKey(0)
    kx, kw, kb, ku, kub = jax.random.split(key, 5)
    x = jax.random.normal(kx, (N, F), jnp.float32)
    W = 0.2 * jax.random.normal(kw, (F, D), jnp.float32)
    b = 0.1 * jax.random.normal(kb, (D,), jnp.float32)
    # synthetic (deterministic) GGN low-rank factors and eigenvalues
    U_w = 0.05 * jax.random.normal(ku, (F, D, K), jnp.float32)
    U_b = 0.05 * jax.random.normal(kub, (D, K), jnp.float32)
    eigs = jnp.linspace(0.1, 5.0, K).astype(jnp.float32)

    z_mean, z_var, ent = ood_detector_forward(x, W, b, U_w, U_b, eigs)
    jax.block_until_ready(ent)

    z_ref, v_ref, e_ref = reference(x, W, b, U_w, U_b, eigs)
    # bf16 matmul inputs (f32 accumulation) -> 2e-2 tolerance
    assert jnp.allclose(z_mean, z_ref, rtol=2e-2, atol=2e-2)
    assert jnp.allclose(z_var, v_ref, rtol=2e-2, atol=2e-2)
    assert jnp.allclose(ent, e_ref, rtol=2e-2, atol=2e-2)

    print("KERNEL_OK")
</pallas_src>

<mosaic_0001>
module attributes {stable_mosaic.version = 11 : i64} {
  func.func @kernel(%arg0: i32, %arg1: memref<8x128xf32, #tpu.memory_space<vmem>>, %arg2: memref<128x1408xbf16, #tpu.memory_space<vmem>>, %arg3: memref<1x1408xf32, #tpu.memory_space<vmem>>, %arg4: memref<8x128xf32, #tpu.memory_space<vmem>>, %arg5: memref<8x128xf32, #tpu.memory_space<vmem>>, %arg6: memref<8x128xf32, #tpu.memory_space<vmem>>) attributes {dimension_semantics = [#tpu.dimension_semantics<parallel>], iteration_bounds = array<i64: 1>, scalar_prefetch = 0 : i64, scratch_operands = 0 : i64, tpu.core_type = #tpu.core_type<tc>, window_params = [{transform_indices = @transform_0, window_bounds = array<i64: 8, 128>}, {pipeline_mode = #tpu.pipeline_mode<synchronous>, transform_indices = @transform_1, window_bounds = array<i64: 128, 1408>}, {pipeline_mode = #tpu.pipeline_mode<synchronous>, transform_indices = @transform_2, window_bounds = array<i64: 1, 1408>}, {transform_indices = @transform_3, window_bounds = array<i64: 8, 128>}, {transform_indices = @transform_4, window_bounds = array<i64: 8, 128>}, {transform_indices = @transform_5, window_bounds = array<i64: 8, 128>}]} {
    %c0 = arith.constant 0 : index
    %c0_0 = arith.constant 0 : index
    %0 = vector.load %arg1[%c0, %c0_0] : memref<8x128xf32, #tpu.memory_space<vmem>>, vector<8x128xf32>
    %1 = arith.truncf %0 : vector<8x128xf32> to vector<8x128xbf16>
    %c0_1 = arith.constant 0 : index
    %c0_2 = arith.constant 0 : index
    %2 = vector.load %arg2[%c0_1, %c0_2] : memref<128x1408xbf16, #tpu.memory_space<vmem>>, vector<128x1408xbf16>
    %cst = arith.constant dense<0.000000e+00> : vector<8x1408xf32>
    %3 = tpu.matmul %1, %2, %cst {dimension_numbers = #tpu.dot_dimension_numbers<[1], [0], [0], [1], [0, 0, 1, 1], [], []>} : vector<8x128xbf16>, vector<128x1408xbf16>, vector<8x1408xf32> -> vector<8x1408xf32>
    %c0_3 = arith.constant 0 : index
    %c0_4 = arith.constant 0 : index
    %4 = vector.load %arg3[%c0_3, %c0_4] : memref<1x1408xf32, #tpu.memory_space<vmem>>, vector<1x1408xf32>
    %5 = vector.broadcast %4 : vector<1x1408xf32> to vector<8x1408xf32>
    %6 = arith.addf %3, %5 : vector<8x1408xf32>
    %7 = vector.extract_strided_slice %6 {offsets = [0, 0], sizes = [8, 128], strides = [1, 1]} : vector<8x1408xf32> to vector<8x128xf32>
    %8 = arith.mulf %0, %0 : vector<8x128xf32>
    %cst_5 = arith.constant dense<0.000000e+00> : vector<8xf32>
    %9 = vector.multi_reduction <add>, %8, %cst_5 [1] : vector<8x128xf32> to vector<8xf32>
    %10 = vector.shape_cast %9 : vector<8xf32> to vector<8x1xf32>
    %cst_6 = arith.constant 1.000000e+00 : f32
    %11 = vector.broadcast %cst_6 : f32 to vector<8x1xf32>
    %12 = arith.addf %10, %11 : vector<8x1xf32>
    %cst_7 = arith.constant 0.000000e+00 : f32
    %13 = vector.broadcast %cst_7 : f32 to vector<8x128xf32>
    %14 = vector.extract_strided_slice %6 {offsets = [0, 128], sizes = [8, 128], strides = [1, 1]} : vector<8x1408xf32> to vector<8x128xf32>
    %15 = arith.mulf %14, %14 : vector<8x128xf32>
    %16 = arith.addf %13, %15 : vector<8x128xf32>
    %17 = vector.extract_strided_slice %6 {offsets = [0, 256], sizes = [8, 128], strides = [1, 1]} : vector<8x1408xf32> to vector<8x128xf32>
    %18 = arith.mulf %17, %17 : vector<8x128xf32>
    %19 = arith.addf %16, %18 : vector<8x128xf32>
    %20 = vector.extract_strided_slice %6 {offsets = [0, 384], sizes = [8, 128], strides = [1, 1]} : vector<8x1408xf32> to vector<8x128xf32>
    %21 = arith.mulf %20, %20 : vector<8x128xf32>
    %22 = arith.addf %19, %21 : vector<8x128xf32>
    %23 = vector.extract_strided_slice %6 {offsets = [0, 512], sizes = [8, 128], strides = [1, 1]} : vector<8x1408xf32> to vector<8x128xf32>
    %24 = arith.mulf %23, %23 : vector<8x128xf32>
    %25 = arith.addf %22, %24 : vector<8x128xf32>
    %26 = vector.extract_strided_slice %6 {offsets = [0, 640], sizes = [8, 128], strides = [1, 1]} : vector<8x1408xf32> to vector<8x128xf32>
    %27 = arith.mulf %26, %26 : vector<8x128xf32>
    %28 = arith.addf %25, %27 : vector<8x128xf32>
    %29 = vector.extract_strided_slice %6 {offsets = [0, 768], sizes = [8, 128], strides = [1, 1]} : vector<8x1408xf32> to vector<8x128xf32>
    %30 = arith.mulf %29, %29 : vector<8x128xf32>
    %31 = arith.addf %28, %30 : vector<8x128xf32>
    %32 = vector.extract_strided_slice %6 {offsets = [0, 896], sizes = [8, 128], strides = [1, 1]} : vector<8x1408xf32> to vector<8x128xf32>
    %33 = arith.mulf %32, %32 : vector<8x128xf32>
    %34 = arith.addf %31, %33 : vector<8x128xf32>
    %35 = vector.extract_strided_slice %6 {offsets = [0, 1024], sizes = [8, 128], strides = [1, 1]} : vector<8x1408xf32> to vector<8x128xf32>
    %36 = arith.mulf %35, %35 : vector<8x128xf32>
    %37 = arith.addf %34, %36 : vector<8x128xf32>
    %38 = vector.extract_strided_slice %6 {offsets = [0, 1152], sizes = [8, 128], strides = [1, 1]} : vector<8x1408xf32> to vector<8x128xf32>
    %39 = arith.mulf %38, %38 : vector<8x128xf32>
    %40 = arith.addf %37, %39 : vector<8x128xf32>
    %41 = vector.extract_strided_slice %6 {offsets = [0, 1280], sizes = [8, 128], strides = [1, 1]} : vector<8x1408xf32> to vector<8x128xf32>
    %42 = arith.mulf %41, %41 : vector<8x128xf32>
    %43 = arith.addf %40, %42 : vector<8x128xf32>
    %44 = vector.broadcast %12 : vector<8x1xf32> to vector<8x128xf32>
    %45 = arith.subf %44, %43 : vector<8x128xf32>
    %cst_8 = arith.constant 0.000000e+00 : f32
    %46 = vector.broadcast %cst_8 : f32 to vector<8x128xf32>
    %47 = arith.maximumf %45, %46 : vector<8x128xf32>
    %c0_9 = arith.constant 0 : index
    %c0_10 = arith.constant 0 : index
    %48 = vector.load %arg4[%c0_9, %c0_10] : memref<8x128xf32, #tpu.memory_space<vmem>>, vector<8x128xf32>
    tpu.vector_store %arg4[%c0_9, %c0_10], %7 {strides = array<i32>} : memref<8x128xf32, #tpu.memory_space<vmem>>, vector<8x128xf32>,
    %c0_11 = arith.constant 0 : index
    %c0_12 = arith.constant 0 : index
    %49 = vector.load %arg5[%c0_11, %c0_12] : memref<8x128xf32, #tpu.memory_space<vmem>>, vector<8x128xf32>
    tpu.vector_store %arg5[%c0_11, %c0_12], %47 {strides = array<i32>} : memref<8x128xf32, #tpu.memory_space<vmem>>, vector<8x128xf32>,
    %50 = tpu.iota {dimensions = array<i32: 1>} : vector<8x128xi32>
    %c8_i32 = arith.constant 8 : i32
    %51 = vector.broadcast %c8_i32 : i32 to vector<8x128xi32>
    %52 = arith.cmpi slt, %50, %51 : vector<8x128xi32>
    %cst_13 = arith.constant 0.392699093 : f32
    %53 = vector.broadcast %cst_13 : f32 to vector<8x128xf32>
    %54 = arith.mulf %53, %47 : vector<8x128xf32>
    %cst_14 = arith.constant 1.000000e+00 : f32
    %55 = vector.broadcast %cst_14 : f32 to vector<8x128xf32>
    %56 = arith.addf %55, %54 : vector<8x128xf32>
    %57 = math.rsqrt %56 : vector<8x128xf32>
    %58 = arith.mulf %7, %57 : vector<8x128xf32>
    %cst_15 = arith.constant -1.000000e+30 : f32
    %59 = vector.broadcast %cst_15 : f32 to vector<8x128xf32>
    %60 = arith.select %52, %58, %59 : vector<8x128xi1>, vector<8x128xf32>
    %cst_16 = arith.constant dense<0xFF800000> : vector<8xf32>
    %61 = vector.multi_reduction <maximumf>, %60, %cst_16 [1] : vector<8x128xf32> to vector<8xf32>
    %62 = vector.shape_cast %61 : vector<8xf32> to vector<8x1xf32>
    %63 = vector.broadcast %62 : vector<8x1xf32> to vector<8x128xf32>
    %64 = arith.subf %60, %63 : vector<8x128xf32>
    %65 = math.exp %64 : vector<8x128xf32>
    %cst_17 = arith.constant 0.000000e+00 : f32
    %66 = vector.broadcast %cst_17 : f32 to vector<8x128xf32>
    %67 = arith.select %52, %65, %66 : vector<8x128xi1>, vector<8x128xf32>
    %cst_18 = arith.constant dense<0.000000e+00> : vector<8xf32>
    %68 = vector.multi_reduction <add>, %67, %cst_18 [1] : vector<8x128xf32> to vector<8xf32>
    %69 = vector.shape_cast %68 : vector<8xf32> to vector<8x1xf32>
    %70 = tpu.reciprocal %69 {approx = true} : vector<8x1xf32> -> vector<8x1xf32>
    %71 = vector.broadcast %70 : vector<8x1xf32> to vector<8x128xf32>
    %72 = arith.mulf %67, %71 : vector<8x128xf32>
    %73 = vector.broadcast %62 : vector<8x1xf32> to vector<8x128xf32>
    %74 = arith.subf %60, %73 : vector<8x128xf32>
    %75 = math.log %69 : vector<8x1xf32>
    %76 = vector.broadcast %75 : vector<8x1xf32> to vector<8x128xf32>
    %77 = arith.subf %74, %76 : vector<8x128xf32>
    %78 = arith.mulf %72, %77 : vector<8x128xf32>
    %cst_19 = arith.constant 0.000000e+00 : f32
    %79 = vector.broadcast %cst_19 : f32 to vector<8x128xf32>
    %80 = arith.select %52, %78, %79 : vector<8x128xi1>, vector<8x128xf32>
    %cst_20 = arith.constant dense<0.000000e+00> : vector<8xf32>
    %81 = vector.multi_reduction <add>, %80, %cst_20 [1] : vector<8x128xf32> to vector<8xf32>
    %82 = vector.shape_cast %81 : vector<8xf32> to vector<8x1xf32>
    %cst_21 = arith.constant 0.000000e+00 : f32
    %83 = vector.broadcast %cst_21 : f32 to vector<8x1xf32>
    %84 = arith.subf %83, %82 : vector<8x1xf32>
    %85 = vector.shape_cast %84 : vector<8x1xf32> to vector<8x1xf32>
    %86 = vector.broadcast %85 : vector<8x1xf32> to vector<8x128xf32>
    %c0_22 = arith.constant 0 : index
    %c0_23 = arith.constant 0 : index
    %87 = vector.load %arg6[%c0_22, %c0_23] : memref<8x128xf32, #tpu.memory_space<vmem>>, vector<8x128xf32>
    tpu.vector_store %arg6[%c0_22, %c0_23], %86 {strides = array<i32>} : memref<8x128xf32, #tpu.memory_space<vmem>>, vector<8x128xf32>,
    return
  }
  func.func @transform_0(%arg0: i32) -> (i32, i32) {
    %c0_i32 = arith.constant 0 : i32
    %c0_i32_0 = arith.constant 0 : i32
    return %arg0, %c0_i32 : i32, i32
  }
  func.func @transform_1(%arg0: i32) -> (i32, i32) {
    %c0_i32 = arith.constant 0 : i32
    %c0_i32_0 = arith.constant 0 : i32
    %c0_i32_1 = arith.constant 0 : i32
    return %c0_i32, %c0_i32_0 : i32, i32
  }
  func.func @transform_2(%arg0: i32) -> (i32, i32) {
    %c0_i32 = arith.constant 0 : i32
    %c0_i32_0 = arith.constant 0 : i32
    %c0_i32_1 = arith.constant 0 : i32
    return %c0_i32, %c0_i32_0 : i32, i32
  }
  func.func @transform_3(%arg0: i32) -> (i32, i32) {
    %c0_i32 = arith.constant 0 : i32
    %c0_i32_0 = arith.constant 0 : i32
    return %arg0, %c0_i32 : i32, i32
  }
  func.func @transform_4(%arg0: i32) -> (i32, i32) {
    %c0_i32 = arith.constant 0 : i32
    %c0_i32_0 = arith.constant 0 : i32
    return %arg0, %c0_i32 : i32, i32
  }
  func.func @transform_5(%arg0: i32) -> (i32, i32) {
    %c0_i32 = arith.constant 0 : i32
    %c0_i32_0 = arith.constant 0 : i32
    return %arg0, %c0_i32 : i32, i32
  }
}

</mosaic_0001>

<llo_original>
// kernel: tpu_custom_call.1
$region0: #{tpu_custom_call.1}
  #allocation0 [shape = 'u32[]', space=smem, size = 0x4, offset = 0x4, fixed_abs, tag = 'smem constant byte address 0x4 - core index']
  #allocation1 [shape = 'u32[144,128]{1,0:T(1,128)}', space=vmem, size = 0x12000, scoped, tag = 'internal scratch']
  %s0 = inlined_call_operand.hbm [shape: f32[8,128], index: 0, kind: input, shape index: {}]
  %s1 = inlined_call_operand.hbm [shape: bf16[128,1408], index: 1, kind: input, shape index: {}]
  %s2 = inlined_call_operand.hbm [shape: f32[1,1408], index: 2, kind: input, shape index: {}]
  %s3 = inlined_call_operand.hbm [shape: f32[8,128], index: 3, kind: output, shape index: {0}]
  %s4 = inlined_call_operand.hbm [shape: f32[8,128], index: 4, kind: output, shape index: {1}]
  %s5 = inlined_call_operand.hbm [shape: f32[8,128], index: 5, kind: output, shape index: {2}]
  %6 = xla_tuple %s3, %s4, %s5
  %s7 = sld [smem:[#allocation0]]
  $region50: #{tpu_custom_call.1} parent=0
    _
  %s9 = ssub.s32 1, %s7
  %s10 = scalar_select 0, %s9, %s7
  $region1: #{tpu_custom_call.1} parent=0
    #allocation2 [shape = 'u8[4096]{0}', space=vmem, size = 0x1000, scoped, tag = 'input window, operand 0, single buffered']
    #allocation3 [shape = 's32[1]{0}', space=sflag, size = 0x4, scoped, tag = 'scoped memory for tpu_custom_call.1']
    #allocation4 [shape = 's32[1]{0}', space=sflag, size = 0x4, scoped, tag = 'scoped memory for tpu_custom_call.1']
    #allocation5 [shape = 'u8[360448]{0}', space=vmem, size = 0x58000, scoped, tag = 'input window, operand 1, single buffered']
    #allocation6 [shape = 's32[1]{0}', space=sflag, size = 0x4, scoped, tag = 'scoped memory for tpu_custom_call.1']
    #allocation7 [shape = 'u8[5632]{0}', space=vmem, size = 0x1800, scoped, tag = 'input window, operand 2, single buffered']
    #allocation8 [shape = 'u8[4096]{0}', space=vmem, size = 0x1000, scoped, tag = 'output window, operand 0, single buffered']
    #allocation9 [shape = 'u8[4096]{0}', space=vmem, size = 0x1000, scoped, tag = 'output window, operand 1, single buffered']
    #allocation10 [shape = 's32[1]{0}', space=sflag, size = 0x4, scoped, tag = 'scoped memory for tpu_custom_call.1']
    #allocation11 [shape = 'u8[4096]{0}', space=vmem, size = 0x1000, scoped, tag = 'output window, operand 2, single buffered']
    %11 = vsyncpa [#allocation3], 0
    %12 = vsyncpa [#allocation6], 0
    %13 = vsyncpa [#allocation4], 0
    %14 = vsyncpa [#allocation10], 0
    // Predicated region
    $region2: #{tpu_custom_call.1} parent=1 // pred_check
      _
    $region3: #{tpu_custom_call.1} parent=1 // pred_check_branch
      %16 = sbr.rel (0) target = $region5
    $region4: #{tpu_custom_call.1} parent=1 // pred_region
      %s18 = ssub.s32 128, 128
      %19 = vsyncadd [#allocation3], %s18
      %s21 = sshll.u32 [#allocation2], 4
      %s22 = int_to_ptr.vmem [resolvable:$true] %s21
      %24 = dma.hbm_to_vmem [thread:$0]  %s0, 128, %s22, [#allocation3]
    $region5: #{tpu_custom_call.1} parent=1 // pred_fallthru
      _
    // Predicated region
    $region6: #{tpu_custom_call.1} parent=1 // pred_check
      _
    $region7: #{tpu_custom_call.1} parent=1 // pred_check_branch
      %26 = sbr.rel (0) target = $region9
    $region8: #{tpu_custom_call.1} parent=1 // pred_region
      %s28 = ssub.s32 11264, 11264
      %29 = vsyncadd [#allocation6], %s28
      %s30 = sshll.u32 [#allocation5], 4
      %s31 = int_to_ptr.vmem [resolvable:$true] %s30
      %36 = dma.hbm_to_vmem [thread:$0]  %s1, 11264, %s31, [#allocation6], 704, 704, 44
    $region9: #{tpu_custom_call.1} parent=1 // pred_fallthru
      _
    // Predicated region
    $region10: #{tpu_custom_call.1} parent=1 // pred_check
      _
    $region11: #{tpu_custom_call.1} parent=1 // pred_check_branch
      %38 = sbr.rel (0) target = $region13
    $region12: #{tpu_custom_call.1} parent=1 // pred_region
      %s40 = ssub.s32 176, 176
      %41 = vsyncadd [#allocation6], %s40
      %s43 = sshll.u32 [#allocation7], 4
      %s44 = int_to_ptr.vmem [resolvable:$true] %s43
      %46 = dma.hbm_to_vmem [thread:$0]  %s2, 176, %s44, [#allocation6]
    $region13: #{tpu_custom_call.1} parent=1 // pred_fallthru
      _
    // Predicated region
    $region14: #{tpu_custom_call.1} parent=1 // pred_check
      _
    $region15: #{tpu_custom_call.1} parent=1 // pred_check_branch
      %48 = sbr.rel (0) target = $region17
    $region16: #{tpu_custom_call.1} parent=1 // pred_region
      %49 = dma.done [#allocation3], 128
    $region17: #{tpu_custom_call.1} parent=1 // pred_fallthru
      _
    // Predicated region
    $region18: #{tpu_custom_call.1} parent=1 // pred_check
      _
    $region19: #{tpu_custom_call.1} parent=1 // pred_check_branch
      %51 = sbr.rel (0) target = $region21
    $region20: #{tpu_custom_call.1} parent=1 // pred_region
      %52 = dma.done [#allocation6], 11264
    $region21: #{tpu_custom_call.1} parent=1 // pred_fallthru
      _
    // Predicated region
    $region22: #{tpu_custom_call.1} parent=1 // pred_check
      _
    $region23: #{tpu_custom_call.1} parent=1 // pred_check_branch
      %54 = sbr.rel (0) target = $region25
    $region24: #{tpu_custom_call.1} parent=1 // pred_region
      %55 = dma.done [#allocation6], 176
    $region25: #{tpu_custom_call.1} parent=1 // pred_fallthru
      _
    %v57 = vld [vmem:[#allocation2] sm:$0xff]
    %v58 = vpack.c.bf16 %v57, %v57
    %v59 = vld [vmem:[#allocation5] sm:$0xff]
    %v60 = vld [vmem:[#allocation5 + $0x8] sm:$0xff]
    %v61 = vld [vmem:[#allocation5 + $0x10] sm:$0xff]
    %v62 = vld [vmem:[#allocation5 + $0x18] sm:$0xff]
    %v63 = vld [vmem:[#allocation5 + $0x20] sm:$0xff]
    %v64 = vld [vmem:[#allocation5 + $0x28] sm:$0xf]
    %v65 = vld [vmem:[#allocation5 + $0x2c] sm:$0xff]
    %v66 = vld [vmem:[#allocation5 + $0x34] sm:$0xff]
    %v67 = vld [vmem:[#allocation5 + $0x3c] sm:$0xff]
    %v68 = vld [vmem:[#allocation5 + $0x44] sm:$0xff]
    %v69 = vld [vmem:[#allocation5 + $0x4c] sm:$0xff]
    %v70 = vld [vmem:[#allocation5 + $0x54] sm:$0xf]
    %v71 = vld [vmem:[#allocation5 + $0x58] sm:$0xff]
    %v72 = vld [vmem:[#allocation5 + $0x60] sm:$0xff]
    %v73 = vld [vmem:[#allocation5 + $0x68] sm:$0xff]
    %v74 = vld [vmem:[#allocation5 + $0x70] sm:$0xff]
    %v75 = vld [vmem:[#allocation5 + $0x78] sm:$0xff]
    %v76 = vld [vmem:[#allocation5 + $0x80] sm:$0xf]
    %v77 = vld [vmem:[#allocation5 + $0x84] sm:$0xff]
    %v78 = vld [vmem:[#allocation5 + $0x8c] sm:$0xff]
    %v79 = vld [vmem:[#allocation5 + $0x94] sm:$0xff]
    %v80 = vld [vmem:[#allocation5 + $0x9c] sm:$0xff]
    %v81 = vld [vmem:[#allocation5 + $0xa4] sm:$0xff]
    %v82 = vld [vmem:[#allocation5 + $0xac] sm:$0xf]
    %v83 = vld [vmem:[#allocation5 + $0xb0] sm:$0xff]
    %v84 = vld [vmem:[#allocation5 + $0xb8] sm:$0xff]
    %v85 = vld [vmem:[#allocation5 + $0xc0] sm:$0xff]
    %v86 = vld [vmem:[#allocation5 + $0xc8] sm:$0xff]
    %v87 = vld [vmem:[#allocation5 + $0xd0] sm:$0xff]
    %v88 = vld [vmem:[#allocation5 + $0xd8] sm:$0xf]
    %v89 = vld [vmem:[#allocation5 + $0xdc] sm:$0xff]
    %v90 = vld [vmem:[#allocation5 + $0xe4] sm:$0xff]
    %v91 = vld [vmem:[#allocation5 + $0xec] sm:$0xff]
    %v92 = vld [vmem:[#allocation5 + $0xf4] sm:$0xff]
    %v93 = vld [vmem:[#allocation5 + $0xfc] sm:$0xff]
    %v94 = vld [vmem:[#allocation5 + $0x104] sm:$0xf]
    %v95 = vld [vmem:[#allocation5 + $0x108] sm:$0xff]
    %v96 = vld [vmem:[#allocation5 + $0x110] sm:$0xff]
    %v97 = vld [vmem:[#allocation5 + $0x118] sm:$0xff]
    %v98 = vld [vmem:[#allocation5 + $0x120] sm:$0xff]
    %v99 = vld [vmem:[#allocation5 + $0x128] sm:$0xff]
    %v100 = vld [vmem:[#allocation5 + $0x130] sm:$0xf]
    %v101 = vld [vmem:[#allocation5 + $0x134] sm:$0xff]
    %v102 = vld [vmem:[#allocation5 + $0x13c] sm:$0xff]
    %v103 = vld [vmem:[#allocation5 + $0x144] sm:$0xff]
    %v104 = vld [vmem:[#allocation5 + $0x14c] sm:$0xff]
    %v105 = vld [vmem:[#allocation5 + $0x154] sm:$0xff]
    %v106 = vld [vmem:[#allocation5 + $0x15c] sm:$0xf]
    %v107 = vld [vmem:[#allocation5 + $0x160] sm:$0xff]
    %v108 = vld [vmem:[#allocation5 + $0x168] sm:$0xff]
    %v109 = vld [vmem:[#allocation5 + $0x170] sm:$0xff]
    %v110 = vld [vmem:[#allocation5 + $0x178] sm:$0xff]
    %v111 = vld [vmem:[#allocation5 + $0x180] sm:$0xff]
    %v112 = vld [vmem:[#allocation5 + $0x188] sm:$0xf]
    %v113 = vld [vmem:[#allocation5 + $0x18c] sm:$0xff]
    %v114 = vld [vmem:[#allocation5 + $0x194] sm:$0xff]
    %v115 = vld [vmem:[#allocation5 + $0x19c] sm:$0xff]
    %v116 = vld [vmem:[#allocation5 + $0x1a4] sm:$0xff]
    %v117 = vld [vmem:[#allocation5 + $0x1ac] sm:$0xff]
    %v118 = vld [vmem:[#allocation5 + $0x1b4] sm:$0xf]
    %v119 = vld [vmem:[#allocation5 + $0x1b8] sm:$0xff]
    %v120 = vld [vmem:[#allocation5 + $0x1c0] sm:$0xff]
    %v121 = vld [vmem:[#allocation5 + $0x1c8] sm:$0xff]
    %v122 = vld [vmem:[#allocation5 + $0x1d0] sm:$0xff]
    %v123 = vld [vmem:[#allocation5 + $0x1d8] sm:$0xff]
    %v124 = vld [vmem:[#allocation5 + $0x1e0] sm:$0xf]
    %v125 = vld [vmem:[#allocation5 + $0x1e4] sm:$0xff]
    %v126 = vld [vmem:[#allocation5 + $0x1ec] sm:$0xff]
    %v127 = vld [vmem:[#allocation5 + $0x1f4] sm:$0xff]
    %v128 = vld [vmem:[#allocation5 + $0x1fc] sm:$0xff]
    %v129 = vld [vmem:[#allocation5 + $0x204] sm:$0xff]
    %v130 = vld [vmem:[#allocation5 + $0x20c] sm:$0xf]
    %v131 = vld [vmem:[#allocation5 + $0x210] sm:$0xff]
    %v132 = vld [vmem:[#allocation5 + $0x218] sm:$0xff]
    %v133 = vld [vmem:[#allocation5 + $0x220] sm:$0xff]
    %v134 = vld [vmem:[#allocation5 + $0x228] sm:$0xff]
    %v135 = vld [vmem:[#allocation5 + $0x230] sm:$0xff]
    %v136 = vld [vmem:[#allocation5 + $0x238] sm:$0xf]
    %v137 = vld [vmem:[#allocation5 + $0x23c] sm:$0xff]
    %v138 = vld [vmem:[#allocation5 + $0x244] sm:$0xff]
    %v139 = vld [vmem:[#allocation5 + $0x24c] sm:$0xff]
    %v140 = vld [vmem:[#allocation5 + $0x254] sm:$0xff]
    %v141 = vld [vmem:[#allocation5 + $0x25c] sm:$0xff]
    %v142 = vld [vmem:[#allocation5 + $0x264] sm:$0xf]
    %v143 = vld [vmem:[#allocation5 + $0x268] sm:$0xff]
    %v144 = vld [vmem:[#allocation5 + $0x270] sm:$0xff]
    %v145 = vld [vmem:[#allocation5 + $0x278] sm:$0xff]
    %v146 = vld [vmem:[#allocation5 + $0x280] sm:$0xff]
    %v147 = vld [vmem:[#allocation5 + $0x288] sm:$0xff]
    %v148 = vld [vmem:[#allocation5 + $0x290] sm:$0xf]
    %v149 = vld [vmem:[#allocation5 + $0x294] sm:$0xff]
    %v150 = vld [vmem:[#allocation5 + $0x29c] sm:$0xff]
    %v151 = vld [vmem:[#allocation5 + $0x2a4] sm:$0xff]
    %v152 = vld [vmem:[#allocation5 + $0x2ac] sm:$0xff]
    %v153 = vld [vmem:[#allocation5 + $0x2b4] sm:$0xff]
    %v154 = vld [vmem:[#allocation5 + $0x2bc] sm:$0xf]
    %v155 = vld [vmem:[#allocation7] sm:$0xff]
    %v156 = vld [vmem:[#allocation7 + $0x8] sm:$0x7]
    %v159 = vlaneseq
    %v160 = vshrl.u32 %v159, 7
    %v161 = vsub.s32 0, %v160
    %v162 = vrot.slane %v155, %v161
    %v163 = vlaneseq
    %v164 = vshrl.u32 %v163, 7
    %v165 = vsub.s32 1, %v164
    %v166 = vrot.slane %v155, %v165
    %v167 = vlaneseq
    %v168 = vshrl.u32 %v167, 7
    %v169 = vsub.s32 2, %v168
    %v170 = vrot.slane %v155, %v169
    %v171 = vlaneseq
    %v172 = vshrl.u32 %v171, 7
    %v173 = vsub.s32 3, %v172
    %v174 = vrot.slane %v155, %v173
    %v175 = vlaneseq
    %v176 = vshrl.u32 %v175, 7
    %v177 = vsub.s32 4, %v176
    %v178 = vrot.slane %v155, %v177
    %v179 = vlaneseq
    %v180 = vshrl.u32 %v179, 7
    %v181 = vsub.s32 5, %v180
    %v182 = vrot.slane %v155, %v181
    %v183 = vlaneseq
    %v184 = vshrl.u32 %v183, 7
    %v185 = vsub.s32 6, %v184
    %v186 = vrot.slane %v155, %v185
    %v187 = vlaneseq
    %v188 = vshrl.u32 %v187, 7
    %v189 = vsub.s32 7, %v188
    %v190 = vrot.slane %v155, %v189
    %v191 = vlaneseq
    %v192 = vshrl.u32 %v191, 7
    %v193 = vsub.s32 0, %v192
    %v194 = vrot.slane %v156, %v193
    %v195 = vlaneseq
    %v196 = vshrl.u32 %v195, 7
    %v197 = vsub.s32 1, %v196
    %v198 = vrot.slane %v156, %v197
    %v199 = vlaneseq
    %v200 = vshrl.u32 %v199, 7
    %v201 = vsub.s32 2, %v200
    %v202 = vrot.slane %v156, %v201
    %v310 = vunpack.c.l.b16 %v59
    %v311 = vunpack.c.h.b16 %v59
    %v312 = vunpack.c.l.b16 %v60
    %v313 = vunpack.c.h.b16 %v60
    %v314 = vunpack.c.l.b16 %v61
    %v315 = vunpack.c.h.b16 %v61
    %v316 = vunpack.c.l.b16 %v62
    %v317 = vunpack.c.h.b16 %v62
    %v318 = vunpack.c.l.b16 %v63
    %v319 = vunpack.c.h.b16 %v63
    %v320 = vunpack.c.l.b16 %v64
    %v321 = vunpack.c.l.b16 %v65
    %v322 = vunpack.c.h.b16 %v65
    %v323 = vunpack.c.l.b16 %v66
    %v324 = vunpack.c.h.b16 %v66
    %v325 = vunpack.c.l.b16 %v67
    %v326 = vunpack.c.h.b16 %v67
    %v327 = vunpack.c.l.b16 %v68
    %v328 = vunpack.c.h.b16 %v68
    %v329 = vunpack.c.l.b16 %v69
    %v330 = vunpack.c.h.b16 %v69
    %v331 = vunpack.c.l.b16 %v70
    %v332 = vunpack.c.l.b16 %v71
    %v333 = vunpack.c.h.b16 %v71
    %v334 = vunpack.c.l.b16 %v72
    %v335 = vunpack.c.h.b16 %v72
    %v336 = vunpack.c.l.b16 %v73
    %v337 = vunpack.c.h.b16 %v73
    %v338 = vunpack.c.l.b16 %v74
    %v339 = vunpack.c.h.b16 %v74
    %v340 = vunpack.c.l.b16 %v75
    %v341 = vunpack.c.h.b16 %v75
    %v342 = vunpack.c.l.b16 %v76
    %v343 = vunpack.c.l.b16 %v77
    %v344 = vunpack.c.h.b16 %v77
    %v345 = vunpack.c.l.b16 %v78
    %v346 = vunpack.c.h.b16 %v78
    %v347 = vunpack.c.l.b16 %v79
    %v348 = vunpack.c.h.b16 %v79
    %v349 = vunpack.c.l.b16 %v80
    %v350 = vunpack.c.h.b16 %v80
    %v351 = vunpack.c.l.b16 %v81
    %v352 = vunpack.c.h.b16 %v81
    %v353 = vunpack.c.l.b16 %v82
    %v354 = vunpack.c.l.b16 %v83
    %v355 = vunpack.c.h.b16 %v83
    %v356 = vunpack.c.l.b16 %v84
    %v357 = vunpack.c.h.b16 %v84
    %v358 = vunpack.c.l.b16 %v85
    %v359 = vunpack.c.h.b16 %v85
    %v360 = vunpack.c.l.b16 %v86
    %v361 = vunpack.c.h.b16 %v86
    %v362 = vunpack.c.l.b16 %v87
    %v363 = vunpack.c.h.b16 %v87
    %v364 = vunpack.c.l.b16 %v88
    %v365 = vunpack.c.l.b16 %v89
    %v366 = vunpack.c.h.b16 %v89
    %v367 = vunpack.c.l.b16 %v90
    %v368 = vunpack.c.h.b16 %v90
    %v369 = vunpack.c.l.b16 %v91
    %v370 = vunpack.c.h.b16 %v91
    %v371 = vunpack.c.l.b16 %v92
    %v372 = vunpack.c.h.b16 %v92
    %v373 = vunpack.c.l.b16 %v93
    %v374 = vunpack.c.h.b16 %v93
    %v375 = vunpack.c.l.b16 %v94
    %v376 = vunpack.c.l.b16 %v95
    %v377 = vunpack.c.h.b16 %v95
    %v378 = vunpack.c.l.b16 %v96
    %v379 = vunpack.c.h.b16 %v96
    %v380 = vunpack.c.l.b16 %v97
    %v381 = vunpack.c.h.b16 %v97
    %v382 = vunpack.c.l.b16 %v98
    %v383 = vunpack.c.h.b16 %v98
    %v384 = vunpack.c.l.b16 %v99
    %v385 = vunpack.c.h.b16 %v99
    %v386 = vunpack.c.l.b16 %v100
    %v387 = vunpack.c.l.b16 %v101
    %v388 = vunpack.c.h.b16 %v101
    %v389 = vunpack.c.l.b16 %v102
    %v390 = vunpack.c.h.b16 %v102
    %v391 = vunpack.c.l.b16 %v103
    %v392 = vunpack.c.h.b16 %v103
    %v393 = vunpack.c.l.b16 %v104
    %v394 = vunpack.c.h.b16 %v104
    %v395 = vunpack.c.l.b16 %v105
    %v396 = vunpack.c.h.b16 %v105
    %v397 = vunpack.c.l.b16 %v106
    %v398 = vunpack.c.l.b16 %v107
    %v399 = vunpack.c.h.b16 %v107
    %v400 = vunpack.c.l.b16 %v108
    %v401 = vunpack.c.h.b16 %v108
    %v402 = vunpack.c.l.b16 %v109
    %v403 = vunpack.c.h.b16 %v109
    %v404 = vunpack.c.l.b16 %v110
    %v405 = vunpack.c.h.b16 %v110
    %v406 = vunpack.c.l.b16 %v111
    %v407 = vunpack.c.h.b16 %v111
    %v408 = vunpack.c.l.b16 %v112
    %v409 = vunpack.c.l.b16 %v113
    %v410 = vunpack.c.h.b16 %v113
    %v411 = vunpack.c.l.b16 %v114
    %v412 = vunpack.c.h.b16 %v114
    %v413 = vunpack.c.l.b16 %v115
    %v414 = vunpack.c.h.b16 %v115
    %v415 = vunpack.c.l.b16 %v116
    %v416 = vunpack.c.h.b16 %v116
    %v417 = vunpack.c.l.b16 %v117
    %v418 = vunpack.c.h.b16 %v117
    %v419 = vunpack.c.l.b16 %v118
    %v420 = vunpack.c.l.b16 %v119
    %v421 = vunpack.c.h.b16 %v119
    %v422 = vunpack.c.l.b16 %v120
    %v423 = vunpack.c.h.b16 %v120
    %v424 = vunpack.c.l.b16 %v121
    %v425 = vunpack.c.h.b16 %v121
    %v426 = vunpack.c.l.b16 %v122
    %v427 = vunpack.c.h.b16 %v122
    %v428 = vunpack.c.l.b16 %v123
    %v429 = vunpack.c.h.b16 %v123
    %v430 = vunpack.c.l.b16 %v124
    %v431 = vunpack.c.l.b16 %v125
    %v432 = vunpack.c.h.b16 %v125
    %v433 = vunpack.c.l.b16 %v126
    %v434 = vunpack.c.h.b16 %v126
    %v435 = vunpack.c.l.b16 %v127
    %v436 = vunpack.c.h.b16 %v127
    %v437 = vunpack.c.l.b16 %v128
    %v438 = vunpack.c.h.b16 %v128
    %v439 = vunpack.c.l.b16 %v129
    %v440 = vunpack.c.h.b16 %v129
    %v441 = vunpack.c.l.b16 %v130
    %v442 = vunpack.c.l.b16 %v131
    %v443 = vunpack.c.h.b16 %v131
    %v444 = vunpack.c.l.b16 %v132
    %v445 = vunpack.c.h.b16 %v132
    %v446 = vunpack.c.l.b16 %v133
    %v447 = vunpack.c.h.b16 %v133
    %v448 = vunpack.c.l.b16 %v134
    %v449 = vunpack.c.h.b16 %v134
    %v450 = vunpack.c.l.b16 %v135
    %v451 = vunpack.c.h.b16 %v135
    %v452 = vunpack.c.l.b16 %v136
    %v453 = vunpack.c.l.b16 %v137
    %v454 = vunpack.c.h.b16 %v137
    %v455 = vunpack.c.l.b16 %v138
    %v456 = vunpack.c.h.b16 %v138
    %v457 = vunpack.c.l.b16 %v139
    %v458 = vunpack.c.h.b16 %v139
    %v459 = vunpack.c.l.b16 %v140
    %v460 = vunpack.c.h.b16 %v140
    %v461 = vunpack.c.l.b16 %v141
    %v462 = vunpack.c.h.b16 %v141
    %v463 = vunpack.c.l.b16 %v142
    %v464 = vunpack.c.l.b16 %v143
    %v465 = vunpack.c.h.b16 %v143
    %v466 = vunpack.c.l.b16 %v144
    %v467 = vunpack.c.h.b16 %v144
    %v468 = vunpack.c.l.b16 %v145
    %v469 = vunpack.c.h.b16 %v145
    %v470 = vunpack.c.l.b16 %v146
    %v471 = vunpack.c.h.b16 %v146
    %v472 = vunpack.c.l.b16 %v147
    %v473 = vunpack.c.h.b16 %v147
    %v474 = vunpack.c.l.b16 %v148
    %v475 = vunpack.c.l.b16 %v149
    %v476 = vunpack.c.h.b16 %v149
    %v477 = vunpack.c.l.b16 %v150
    %v478 = vunpack.c.h.b16 %v150
    %v479 = vunpack.c.l.b16 %v151
    %v480 = vunpack.c.h.b16 %v151
    %v481 = vunpack.c.l.b16 %v152
    %v482 = vunpack.c.h.b16 %v152
    %v483 = vunpack.c.l.b16 %v153
    %v484 = vunpack.c.h.b16 %v153
    %v485 = vunpack.c.l.b16 %v154
    %v486 = vpack.c.b16 %v321, %v310
    %v487 = vpack.c.b16 %v322, %v311
    %v488 = vpack.c.b16 %v323, %v312
    %v489 = vpack.c.b16 %v324, %v313
    %v490 = vpack.c.b16 %v325, %v314
    %v491 = vpack.c.b16 %v326, %v315
    %v492 = vpack.c.b16 %v327, %v316
    %v493 = vpack.c.b16 %v328, %v317
    %v494 = vpack.c.b16 %v329, %v318
    %v495 = vpack.c.b16 %v330, %v319
    %v496 = vpack.c.b16 %v331, %v320
    %v497 = vpack.c.b16 %v343, %v332
    %v498 = vpack.c.b16 %v344, %v333
    %v499 = vpack.c.b16 %v345, %v334
    %v500 = vpack.c.b16 %v346, %v335
    %v501 = vpack.c.b16 %v347, %v336
    %v502 = vpack.c.b16 %v348, %v337
    %v503 = vpack.c.b16 %v349, %v338
    %v504 = vpack.c.b16 %v350, %v339
    %v505 = vpack.c.b16 %v351, %v340
    %v506 = vpack.c.b16 %v352, %v341
    %v507 = vpack.c.b16 %v353, %v342
    %v508 = vpack.c.b16 %v365, %v354
    %v509 = vpack.c.b16 %v366, %v355
    %v510 = vpack.c.b16 %v367, %v356
    %v511 = vpack.c.b16 %v368, %v357
    %v512 = vpack.c.b16 %v369, %v358
    %v513 = vpack.c.b16 %v370, %v359
    %v514 = vpack.c.b16 %v371, %v360
    %v515 = vpack.c.b16 %v372, %v361
    %v516 = vpack.c.b16 %v373, %v362
    %v517 = vpack.c.b16 %v374, %v363
    %v518 = vpack.c.b16 %v375, %v364
    %v519 = vpack.c.b16 %v387, %v376
    %v520 = vpack.c.b16 %v388, %v377
    %v521 = vpack.c.b16 %v389, %v378
    %v522 = vpack.c.b16 %v390, %v379
    %v523 = vpack.c.b16 %v391, %v380
    %v524 = vpack.c.b16 %v392, %v381
    %v525 = vpack.c.b16 %v393, %v382
    %v526 = vpack.c.b16 %v394, %v383
    %v527 = vpack.c.b16 %v395, %v384
    %v528 = vpack.c.b16 %v396, %v385
    %v529 = vpack.c.b16 %v397, %v386
    %v530 = vpack.c.b16 %v409, %v398
    %v531 = vpack.c.b16 %v410, %v399
    %v532 = vpack.c.b16 %v411, %v400
    %v533 = vpack.c.b16 %v412, %v401
    %v534 = vpack.c.b16 %v413, %v402
    %v535 = vpack.c.b16 %v414, %v403
    %v536 = vpack.c.b16 %v415, %v404
    %v537 = vpack.c.b16 %v416, %v405
    %v538 = vpack.c.b16 %v417, %v406
    %v539 = vpack.c.b16 %v418, %v407
    %v540 = vpack.c.b16 %v419, %v408
    %v541 = vpack.c.b16 %v431, %v420
    %v542 = vpack.c.b16 %v432, %v421
    %v543 = vpack.c.b16 %v433, %v422
    %v544 = vpack.c.b16 %v434, %v423
    %v545 = vpack.c.b16 %v435, %v424
    %v546 = vpack.c.b16 %v436, %v425
    %v547 = vpack.c.b16 %v437, %v426
    %v548 = vpack.c.b16 %v438, %v427
    %v549 = vpack.c.b16 %v439, %v428
    %v550 = vpack.c.b16 %v440, %v429
    %v551 = vpack.c.b16 %v441, %v430
    %v552 = vpack.c.b16 %v453, %v442
    %v553 = vpack.c.b16 %v454, %v443
    %v554 = vpack.c.b16 %v455, %v444
    %v555 = vpack.c.b16 %v456, %v445
    %v556 = vpack.c.b16 %v457, %v446
    %v557 = vpack.c.b16 %v458, %v447
    %v558 = vpack.c.b16 %v459, %v448
    %v559 = vpack.c.b16 %v460, %v449
    %v560 = vpack.c.b16 %v461, %v450
    %v561 = vpack.c.b16 %v462, %v451
    %v562 = vpack.c.b16 %v463, %v452
    %v563 = vpack.c.b16 %v475, %v464
    %v564 = vpack.c.b16 %v476, %v465
    %v565 = vpack.c.b16 %v477, %v466
    %v566 = vpack.c.b16 %v478, %v467
    %v567 = vpack.c.b16 %v479, %v468
    %v568 = vpack.c.b16 %v480, %v469
    %v569 = vpack.c.b16 %v481, %v470
    %v570 = vpack.c.b16 %v482, %v471
    %v571 = vpack.c.b16 %v483, %v472
    %v572 = vpack.c.b16 %v484, %v473
    %v573 = vpack.c.b16 %v485, %v474
    %662 = vmatprep.subr.bf16.mxu0 %v564
    %663 = vmatpush1.bf16.msra.mxu0 %v563
    %664 = vmatprep.subr.bf16.mxu0 %v553
    %665 = vmatpush1.bf16.msra.mxu0 %v552
    %666 = vmatprep.subr.bf16.mxu0 %v542
    %667 = vmatpush1.bf16.msra.mxu0 %v541
    %668 = vmatprep.subr.bf16.mxu0 %v531
    %669 = vmatpush1.bf16.msra.mxu0 %v530
    %670 = vmatprep.subr.bf16.mxu0 %v520
    %671 = vmatpush1.bf16.msra.mxu0 %v519
    %672 = vmatprep.subr.bf16.mxu0 %v509
    %673 = vmatpush1.bf16.msra.mxu0 %v508
    %674 = vmatprep.subr.bf16.mxu0 %v498
    %675 = vmatpush1.bf16.msra.mxu0 %v497
    %676 = vmatprep.subr.bf16.mxu0 %v487
    %677 = vmatpush1.bf16.msra.mxu0 %v486
    %678 = vmatprep.subr.bf16.mxu0 0
    %679 = vmatpush2.bf16.msra.mxu0 0
    %680 = vmatprep.subr.bf16.mxu0 0
    %681 = vmatpush2.bf16.msra.mxu0 0
    %682 = vmatprep.subr.bf16.mxu0 0
    %683 = vmatpush2.bf16.msra.mxu0 0
    %684 = vmatprep.subr.bf16.mxu0 0
    %685 = vmatpush2.bf16.msra.mxu0 0
    %686 = vmatprep.subr.bf16.mxu0 0
    %687 = vmatpush2.bf16.msra.mxu0 0
    %688 = vmatprep.subr.bf16.mxu0 0
    %689 = vmatpush2.bf16.msra.mxu0 0
    %690 = vmatprep.subr.bf16.mxu0 0
    %691 = vmatpush2.bf16.msra.mxu0 0
    %692 = vmatprep.subr.bf16.mxu0 0
    %693 = vmatpush2.bf16.msra.mxu0 0
    %694 = vmatprep.mubr.bf16.mxu0 0
    %695 = vmatmul.mubr.bf16.gmra.mxu0 %v58
    %v696 = vpop.f32.mrf.mxu0
    %v697 = vadd.f32 %v162, %v696
    %v698 = vpop.f32.mrf.mxu0
    %v699 = vadd.f32 %v166, %v698
    %v700 = vpop.f32.mrf.mxu0
    %v701 = vpop.f32.mrf.mxu0
    %702 = vdwg.mxu0
    %703 = vmatprep.subr.bf16.mxu0 %v566
    %704 = vmatpush1.bf16.msra.mxu0 %v565
    %705 = vmatprep.subr.bf16.mxu0 %v555
    %706 = vmatpush1.bf16.msra.mxu0 %v554
    %707 = vmatprep.subr.bf16.mxu0 %v544
    %708 = vmatpush1.bf16.msra.mxu0 %v543
    %709 = vmatprep.subr.bf16.mxu0 %v533
    %710 = vmatpush1.bf16.msra.mxu0 %v532
    %711 = vmatprep.subr.bf16.mxu0 %v522
    %712 = vmatpush1.bf16.msra.mxu0 %v521
    %713 = vmatprep.subr.bf16.mxu0 %v511
    %714 = vmatpush1.bf16.msra.mxu0 %v510
    %715 = vmatprep.subr.bf16.mxu0 %v500
    %716 = vmatpush1.bf16.msra.mxu0 %v499
    %717 = vmatprep.subr.bf16.mxu0 %v489
    %718 = vmatpush1.bf16.msra.mxu0 %v488
    %719 = vmatprep.subr.bf16.mxu0 0
    %720 = vmatpush2.bf16.msra.mxu0 0
    %721 = vmatprep.subr.bf16.mxu0 0
    %722 = vmatpush2.bf16.msra.mxu0 0
    %723 = vmatprep.subr.bf16.mxu0 0
    %724 = vmatpush2.bf16.msra.mxu0 0
    %725 = vmatprep.subr.bf16.mxu0 0
    %726 = vmatpush2.bf16.msra.mxu0 0
    %727 = vmatprep.subr.bf16.mxu0 0
    %728 = vmatpush2.bf16.msra.mxu0 0
    %729 = vmatprep.subr.bf16.mxu0 0
    %730 = vmatpush2.bf16.msra.mxu0 0
    %731 = vmatprep.subr.bf16.mxu0 0
    %732 = vmatpush2.bf16.msra.mxu0 0
    %733 = vmatprep.subr.bf16.mxu0 0
    %734 = vmatpush2.bf16.msra.mxu0 0
    %735 = vmatprep.mubr.bf16.mxu0 0
    %736 = vmatmul.mubr.bf16.gmra.mxu0 %v58
    %v737 = vpop.f32.mrf.mxu0
    %v738 = vadd.f32 %v170, %v737
    %v739 = vpop.f32.mrf.mxu0
    %v740 = vadd.f32 %v174, %v739
    %v741 = vpop.f32.mrf.mxu0
    %v742 = vpop.f32.mrf.mxu0
    %743 = vdwg.mxu0
    %744 = vmatprep.subr.bf16.mxu0 %v568
    %745 = vmatpush1.bf16.msra.mxu0 %v567
    %746 = vmatprep.subr.bf16.mxu0 %v557
    %747 = vmatpush1.bf16.msra.mxu0 %v556
    %748 = vmatprep.subr.bf16.mxu0 %v546
    %749 = vmatpush1.bf16.msra.mxu0 %v545
    %750 = vmatprep.subr.bf16.mxu0 %v535
    %751 = vmatpush1.bf16.msra.mxu0 %v534
    %752 = vmatprep.subr.bf16.mxu0 %v524
    %753 = vmatpush1.bf16.msra.mxu0 %v523
    %754 = vmatprep.subr.bf16.mxu0 %v513
    %755 = vmatpush1.bf16.msra.mxu0 %v512
    %756 = vmatprep.subr.bf16.mxu0 %v502
    %757 = vmatpush1.bf16.msra.mxu0 %v501
    %758 = vmatprep.subr.bf16.mxu0 %v491
    %759 = vmatpush1.bf16.msra.mxu0 %v490
    %760 = vmatprep.subr.bf16.mxu0 0
    %761 = vmatpush2.bf16.msra.mxu0 0
    %762 = vmatprep.subr.bf16.mxu0 0
    %763 = vmatpush2.bf16.msra.mxu0 0
    %764 = vmatprep.subr.bf16.mxu0 0
    %765 = vmatpush2.bf16.msra.mxu0 0
    %766 = vmatprep.subr.bf16.mxu0 0
    %767 = vmatpush2.bf16.msra.mxu0 0
    %768 = vmatprep.subr.bf16.mxu0 0
    %769 = vmatpush2.bf16.msra.mxu0 0
    %770 = vmatprep.subr.bf16.mxu0 0
    %771 = vmatpush2.bf16.msra.mxu0 0
    %772 = vmatprep.subr.bf16.mxu0 0
    %773 = vmatpush2.bf16.msra.mxu0 0
    %774 = vmatprep.subr.bf16.mxu0 0
    %775 = vmatpush2.bf16.msra.mxu0 0
    %776 = vmatprep.mubr.bf16.mxu0 0
    %777 = vmatmul.mubr.bf16.gmra.mxu0 %v58
    %v778 = vpop.f32.mrf.mxu0
    %v779 = vadd.f32 %v178, %v778
    %v780 = vpop.f32.mrf.mxu0
    %v781 = vadd.f32 %v182, %v780
    %v782 = vpop.f32.mrf.mxu0
    %v783 = vpop.f32.mrf.mxu0
    %784 = vdwg.mxu0
    %785 = vmatprep.subr.bf16.mxu0 %v570
    %786 = vmatpush1.bf16.msra.mxu0 %v569
    %787 = vmatprep.subr.bf16.mxu0 %v559
    %788 = vmatpush1.bf16.msra.mxu0 %v558
    %789 = vmatprep.subr.bf16.mxu0 %v548
    %790 = vmatpush1.bf16.msra.mxu0 %v547
    %791 = vmatprep.subr.bf16.mxu0 %v537
    %792 = vmatpush1.bf16.msra.mxu0 %v536
    %793 = vmatprep.subr.bf16.mxu0 %v526
    %794 = vmatpush1.bf16.msra.mxu0 %v525
    %795 = vmatprep.subr.bf16.mxu0 %v515
    %796 = vmatpush1.bf16.msra.mxu0 %v514
    %797 = vmatprep.subr.bf16.mxu0 %v504
    %798 = vmatpush1.bf16.msra.mxu0 %v503
    %799 = vmatprep.subr.bf16.mxu0 %v493
    %800 = vmatpush1.bf16.msra.mxu0 %v492
    %801 = vmatprep.subr.bf16.mxu0 0
    %802 = vmatpush2.bf16.msra.mxu0 0
    %803 = vmatprep.subr.bf16.mxu0 0
    %804 = vmatpush2.bf16.msra.mxu0 0
    %805 = vmatprep.subr.bf16.mxu0 0
    %806 = vmatpush2.bf16.msra.mxu0 0
    %807 = vmatprep.subr.bf16.mxu0 0
    %808 = vmatpush2.bf16.msra.mxu0 0
    %809 = vmatprep.subr.bf16.mxu0 0
    %810 = vmatpush2.bf16.msra.mxu0 0
    %811 = vmatprep.subr.bf16.mxu0 0
    %812 = vmatpush2.bf16.msra.mxu0 0
    %813 = vmatprep.subr.bf16.mxu0 0
    %814 = vmatpush2.bf16.msra.mxu0 0
    %815 = vmatprep.subr.bf16.mxu0 0
    %816 = vmatpush2.bf16.msra.mxu0 0
    %817 = vmatprep.mubr.bf16.mxu0 0
    %818 = vmatmul.mubr.bf16.gmra.mxu0 %v58
    %v819 = vpop.f32.mrf.mxu0
    %v820 = vadd.f32 %v186, %v819
    %v821 = vpop.f32.mrf.mxu0
    %v822 = vadd.f32 %v190, %v821
    %v823 = vpop.f32.mrf.mxu0
    %v824 = vpop.f32.mrf.mxu0
    %825 = vdwg.mxu0
    %826 = vmatprep.subr.bf16.mxu0 %v572
    %827 = vmatpush1.bf16.msra.mxu0 %v571
    %828 = vmatprep.subr.bf16.mxu0 %v561
    %829 = vmatpush1.bf16.msra.mxu0 %v560
    %830 = vmatprep.subr.bf16.mxu0 %v550
    %831 = vmatpush1.bf16.msra.mxu0 %v549
    %832 = vmatprep.subr.bf16.mxu0 %v539
    %833 = vmatpush1.bf16.msra.mxu0 %v538
    %834 = vmatprep.subr.bf16.mxu0 %v528
    %835 = vmatpush1.bf16.msra.mxu0 %v527
    %836 = vmatprep.subr.bf16.mxu0 %v517
    %837 = vmatpush1.bf16.msra.mxu0 %v516
    %838 = vmatprep.subr.bf16.mxu0 %v506
    %839 = vmatpush1.bf16.msra.mxu0 %v505
    %840 = vmatprep.subr.bf16.mxu0 %v495
    %841 = vmatpush1.bf16.msra.mxu0 %v494
    %842 = vmatprep.subr.bf16.mxu0 0
    %843 = vmatpush2.bf16.msra.mxu0 0
    %844 = vmatprep.subr.bf16.mxu0 0
    %845 = vmatpush2.bf16.msra.mxu0 0
    %846 = vmatprep.subr.bf16.mxu0 0
    %847 = vmatpush2.bf16.msra.mxu0 0
    %848 = vmatprep.subr.bf16.mxu0 0
    %849 = vmatpush2.bf16.msra.mxu0 0
    %850 = vmatprep.subr.bf16.mxu0 0
    %851 = vmatpush2.bf16.msra.mxu0 0
    %852 = vmatprep.subr.bf16.mxu0 0
    %853 = vmatpush2.bf16.msra.mxu0 0
    %854 = vmatprep.subr.bf16.mxu0 0
    %855 = vmatpush2.bf16.msra.mxu0 0
    %856 = vmatprep.subr.bf16.mxu0 0
    %857 = vmatpush2.bf16.msra.mxu0 0
    %858 = vmatprep.mubr.bf16.mxu0 0
    %859 = vmatmul.mubr.bf16.gmra.mxu0 %v58
    %v860 = vpop.f32.mrf.mxu0
    %v861 = vadd.f32 %v194, %v860
    %v862 = vpop.f32.mrf.mxu0
    %v863 = vadd.f32 %v198, %v862
    %v864 = vpop.f32.mrf.mxu0
    %v865 = vpop.f32.mrf.mxu0
    %866 = vdwg.mxu0
    %867 = vmatprep.subr.bf16.mxu0 0
    %868 = vmatpush1.bf16.msra.mxu0 %v573
    %869 = vmatprep.subr.bf16.mxu0 0
    %870 = vmatpush1.bf16.msra.mxu0 %v562
    %871 = vmatprep.subr.bf16.mxu0 0
    %872 = vmatpush1.bf16.msra.mxu0 %v551
    %873 = vmatprep.subr.bf16.mxu0 0
    %874 = vmatpush1.bf16.msra.mxu0 %v540
    %875 = vmatprep.subr.bf16.mxu0 0
    %876 = vmatpush1.bf16.msra.mxu0 %v529
    %877 = vmatprep.subr.bf16.mxu0 0
    %878 = vmatpush1.bf16.msra.mxu0 %v518
    %879 = vmatprep.subr.bf16.mxu0 0
    %880 = vmatpush1.bf16.msra.mxu0 %v507
    %881 = vmatprep.subr.bf16.mxu0 0
    %882 = vmatpush1.bf16.msra.mxu0 %v496
    %883 = vmatprep.subr.bf16.mxu0 0
    %884 = vmatpush2.bf16.msra.mxu0 0
    %885 = vmatprep.subr.bf16.mxu0 0
    %886 = vmatpush2.bf16.msra.mxu0 0
    %887 = vmatprep.subr.bf16.mxu0 0
    %888 = vmatpush2.bf16.msra.mxu0 0
    %889 = vmatprep.subr.bf16.mxu0 0
    %890 = vmatpush2.bf16.msra.mxu0 0
    %891 = vmatprep.subr.bf16.mxu0 0
    %892 = vmatpush2.bf16.msra.mxu0 0
    %893 = vmatprep.subr.bf16.mxu0 0
    %894 = vmatpush2.bf16.msra.mxu0 0
    %895 = vmatprep.subr.bf16.mxu0 0
    %896 = vmatpush2.bf16.msra.mxu0 0
    %897 = vmatprep.subr.bf16.mxu0 0
    %898 = vmatpush2.bf16.msra.mxu0 0
    %899 = vmatprep.mubr.bf16.mxu0 0
    %900 = vmatmul.mubr.bf16.gmra.mxu0 %v58
    %v901 = vpop.f32.mrf.mxu0
    %v902 = vadd.f32 %v202, %v901
    %v903 = vpop.f32.mrf.mxu0
    %v904 = vpop.f32.mrf.mxu0
    %v905 = vpop.f32.mrf.mxu0
    %906 = vdwg.mxu0
    %v907 = vmul.f32 %v57, %v57
    %908 = vadd.xlane.f32.xlu0 %v907
    %v909 = vpop.xlane.xlu0 %908
    %v910 = vadd.f32 %v909, 1.0
    %v911 = vmul.f32 %v699, %v699
    %v912 = vadd.f32 %v911, 0.0
    %v913 = vmul.f32 %v738, %v738
    %v914 = vadd.f32 %v912, %v913
    %v915 = vmul.f32 %v740, %v740
    %v916 = vadd.f32 %v914, %v915
    %v917 = vmul.f32 %v779, %v779
    %v918 = vadd.f32 %v916, %v917
    %v919 = vmul.f32 %v781, %v781
    %v920 = vadd.f32 %v918, %v919
    %v921 = vmul.f32 %v820, %v820
    %v922 = vadd.f32 %v920, %v921
    %v923 = vmul.f32 %v822, %v822
    %v924 = vadd.f32 %v922, %v923
    %v925 = vmul.f32 %v861, %v861
    %v926 = vadd.f32 %v924, %v925
    %v927 = vmul.f32 %v863, %v863
    %v928 = vadd.f32 %v926, %v927
    %v929 = vmul.f32 %v902, %v902
    %v930 = vadd.f32 %v928, %v929
    %v931 = vsub.f32 %v910, %v930
    %v932 = vmax.f32 %v931, 0.0
    %933 = vst [vmem:[#allocation8] sm:$0xff] %v697
    %934 = vst [vmem:[#allocation9] sm:$0xff] %v932
    %v935 = vlaneseq
    %v936 = vand.u32 %v935, 127
    %vm937 = vcmp.lt.s32.totalorder %v936, 8
    %v938 = vmul.f32 %v932, 0.3926991
    %v939 = vadd.f32 %v938, 1.0
    %v940 = vrsqrt.pop %v939
    %v941 = vmul.f32 %v697, %v940
    %v942 = vsel %vm937, %v941, -1e+30
    %943 = vmax.xlane.f32.xlu0 %v942
    %v944 = vpop.xlane.xlu0 %943
    %v945 = vsub.f32 %v942, %v944
    %v946 = vmul.f32 %v945, 1.442695
    %v947 = vpow.pop %v946
    %v948 = vsel %vm937, %v947, 0.0
    %949 = vadd.xlane.f32.xlu0 %v948
    %v950 = vpop.xlane.xlu0 %949
    %v951 = vrcp.pop %v950
    %v952 = vmul.f32 %v948, %v951
    %v953 = vlog2.pop %v950
    %v954 = vmul.f32 %v953, 0.6931472
    %v955 = vsub.f32 %v945, %v954
    %v956 = vmul.f32 %v952, %v955
    %v957 = vsel %vm937, %v956, 0.0
    %958 = vadd.xlane.f32.xlu0 %v957
    %v959 = vpop.xlane.xlu0 %958
    %v960 = vsub.f32 0.0, %v959
    %961 = vst [vmem:[#allocation11] sm:$0xff] %v960
    // Predicated region
    $region26: #{tpu_custom_call.1} parent=1 // pred_check
      _
    $region27: #{tpu_custom_call.1} parent=1 // pred_check_branch
      %963 = sbr.rel (0) target = $region29
    $region28: #{tpu_custom_call.1} parent=1 // pred_region
      %s965 = ssub.s32 128, 128
      %966 = vsyncadd [#allocation4], %s965
      %s968 = sshll.u32 [#allocation8], 4
      %s969 = int_to_ptr.vmem [resolvable:$true] %s968
      %971 = dma.vmem_to_hbm [thread:$0]  %s969, 128, %s3, [#allocation4]
    $region29: #{tpu_custom_call.1} parent=1 // pred_fallthru
      _
    // Predicated region
    $region30: #{tpu_custom_call.1} parent=1 // pred_check
      _
    $region31: #{tpu_custom_call.1} parent=1 // pred_check_branch
      %973 = sbr.rel (0) target = $region33
    $region32: #{tpu_custom_call.1} parent=1 // pred_region
      %s975 = ssub.s32 128, 128
      %976 = vsyncadd [#allocation10], %s975
      %s978 = sshll.u32 [#allocation9], 4
      %s979 = int_to_ptr.vmem [resolvable:$true] %s978
      %981 = dma.vmem_to_hbm [thread:$0]  %s979, 128, %s4, [#allocation10]
    $region33: #{tpu_custom_call.1} parent=1 // pred_fallthru
      _
    // Predicated region
    $region34: #{tpu_custom_call.1} parent=1 // pred_check
      _
    $region35: #{tpu_custom_call.1} parent=1 // pred_check_branch
      %983 = sbr.rel (0) target = $region37
    $region36: #{tpu_custom_call.1} parent=1 // pred_region
      %s985 = ssub.s32 128, 128
      %986 = vsyncadd [#allocation10], %s985
      %s988 = sshll.u32 [#allocation11], 4
      %s989 = int_to_ptr.vmem [resolvable:$true] %s988
      %991 = dma.vmem_to_hbm [thread:$0]  %s989, 128, %s5, [#allocation10]
    $region37: #{tpu_custom_call.1} parent=1 // pred_fallthru
      _
    // Predicated region
    $region38: #{tpu_custom_call.1} parent=1 // pred_check
      _
    $region39: #{tpu_custom_call.1} parent=1 // pred_check_branch
      %993 = sbr.rel (0) target = $region41
    $region40: #{tpu_custom_call.1} parent=1 // pred_region
      %994 = dma.done [#allocation4], 128
    $region41: #{tpu_custom_call.1} parent=1 // pred_fallthru
      _
    // Predicated region
    $region42: #{tpu_custom_call.1} parent=1 // pred_check
      _
    $region43: #{tpu_custom_call.1} parent=1 // pred_check_branch
      %996 = sbr.rel (0) target = $region45
    $region44: #{tpu_custom_call.1} parent=1 // pred_region
      %997 = dma.done [#allocation10], 128
    $region45: #{tpu_custom_call.1} parent=1 // pred_fallthru
      _
    // Predicated region
    $region46: #{tpu_custom_call.1} parent=1 // pred_check
      _
    $region47: #{tpu_custom_call.1} parent=1 // pred_check_branch
      %999 = sbr.rel (0) target = $region49
    $region48: #{tpu_custom_call.1} parent=1 // pred_region
      %1000 = dma.done [#allocation10], 128
    $region49: #{tpu_custom_call.1} parent=1 // pred_fallthru
      _
    %1001 = vsyncpa [#allocation3], 1
    %1002 = vsyncpa [#allocation6], 1
    %1003 = vsyncpa [#allocation4], 1
    %1004 = vsyncpa [#allocation10], 1

</llo_original>
